<compile_context>
chip_gen: v6e
topology: v6e:2x2x1
jax: 0.10.0
libtpu: 0.0.40
codegen_flags: <defaults>
</compile_context>

<pallas_src>
import functools

import jax
import jax.numpy as jnp
from jax.experimental import pallas as pl
from jax.experimental.pallas import tpu as pltpu


def _round_up(x, m):
    return ((x + m - 1) // m) * m


def query_common_kernel(x_ref, w1_ref, b1_ref, w2_ref, b2_ref, out_ref):
    # fc1 on the MXU: bf16 inputs, f32 accumulation.
    x = x_ref[...]                                                # (TILE_B, in) bf16
    h = jnp.dot(x, w1_ref[...], preferred_element_type=jnp.float32)
    h = jnp.maximum(h + b1_ref[...], 0.0)                         # (TILE_B, hid) f32
    # TODO(synk): dropout is identity in eval mode; training-mode dropout would
    # use pltpu.prng_seed / pltpu.prng_random_bits to build a keep-mask.
    # fc2 (output width 1): VPU multiply + lane reduction instead of an N=1
    # matmul -- the MXU would waste 127/255 columns and a full drain for ~0 FLOPs.
    g = jnp.sum(h * w2_ref[...], axis=-1, keepdims=True)          # (TILE_B, 1) f32
    g = g + b2_ref[0, 0]                                          # scalar bias from SMEM
    out_ref[...] = jax.nn.sigmoid(g).astype(out_ref.dtype)


@functools.partial(jax.jit, static_argnames=("tile_b",))
def query_common_forward(input_feats, w1, b1, w2_row, b2, *, tile_b=1024):
    """input_feats: (B, input_size) f32.

    w1:     (input_size, hidden)  (pre-transposed nn.Linear weight)
    b1:     (1, hidden)
    w2_row: (1, hidden)           (fc2 weight as a row vector)
    b2:     (1, 1)
    Returns gate_params (B, 1) f32.
    """
    B, input_size = input_feats.shape
    hidden = w1.shape[1]

    # Cast matmul inputs to bf16 (halves HBM traffic for x); accumulation and
    # all elementwise math remain f32.
    x_bf16 = input_feats.astype(jnp.bfloat16)
    w1_bf16 = w1.astype(jnp.bfloat16)

    # Batch tiling: big tiles amortize per-grid-step overhead; clamp for small B
    # and pad the batch so TILE_B divides it (sublane multiple of 8).
    TILE_B = min(tile_b, _round_up(B, 8))
    Bp = _round_up(B, TILE_B)
    if Bp != B:
        x_bf16 = jnp.pad(x_bf16, ((0, Bp - B), (0, 0)))

    grid = (Bp // TILE_B,)

    out = pl.pallas_call(
        query_common_kernel,
        out_shape=jax.ShapeDtypeStruct((Bp, 1), jnp.float32),
        grid=grid,
        in_specs=[
            # x streams tile-by-tile over the batch.
            pl.BlockSpec((TILE_B, input_size), lambda i: (i, 0)),
            # Weights / biases: same block every step -> loaded once, VMEM-resident.
            pl.BlockSpec((input_size, hidden), lambda i: (0, 0)),
            pl.BlockSpec((1, hidden), lambda i: (0, 0)),
            pl.BlockSpec((1, hidden), lambda i: (0, 0)),
            # b2 scalar lives in SMEM (no padded (8,128) VMEM tile).
            pl.BlockSpec((1, 1), lambda i: (0, 0),
                         memory_space=pltpu.MemorySpace.SMEM),
        ],
        out_specs=pl.BlockSpec((TILE_B, 1), lambda i: (i, 0)),
        compiler_params=pltpu.CompilerParams(
            dimension_semantics=("parallel",),  # v7x: shard batch across both TCs
        ),
    )(x_bf16, w1_bf16, b1, w2_row, b2)

    return out[:B]


if __name__ == "__main__":
    # Small shapes consistent with the module: batch=8, input_size=32, output_size=64
    B, input_size, output_size = 8, 32, 64

    key = jax.random.PRNGKey(0)
    kx, kw1, kb1, kw2, kb2 = jax.random.split(key, 5)

    input_feats = jax.random.normal(kx, (B, input_size), dtype=jnp.float32)

    # Deterministic parameter init (mirrors nn.Linear shapes; stored transposed,
    # fc2 weight stored as a row vector for the VPU reduction path).
    w1 = jax.random.normal(kw1, (input_size, output_size), dtype=jnp.float32) * 0.1
    b1 = jax.random.normal(kb1, (1, output_size), dtype=jnp.float32) * 0.1
    w2_row = jax.random.normal(kw2, (1, output_size), dtype=jnp.float32) * 0.1
    b2 = jax.random.normal(kb2, (1, 1), dtype=jnp.float32) * 0.1

    out = query_common_forward(input_feats, w1, b1, w2_row, b2)
    out = jax.block_until_ready(out)

    # Reference check in plain JAX (f32 end-to-end, eval-mode dropout).
    ref = jax.nn.sigmoid(
        jnp.maximum(input_feats @ w1 + b1, 0.0) @ w2_row.T + b2
    )
    assert out.shape == (B, 1)
    # Tolerance loosened because kernel casts x/W1 to bf16 (f32 accumulation).
    assert jnp.allclose(out, ref, atol=2e-2, rtol=2e-2), "mismatch vs reference"

    print("KERNEL_OK")
</pallas_src>

<mosaic_0001>
module attributes {stable_mosaic.version = 11 : i64} {
  func.func @query_common_kernel(%arg0: i32, %arg1: memref<8x32xbf16, #tpu.memory_space<vmem>>, %arg2: memref<32x64xbf16, #tpu.memory_space<vmem>>, %arg3: memref<1x64xf32, #tpu.memory_space<vmem>>, %arg4: memref<1x64xf32, #tpu.memory_space<vmem>>, %arg5: memref<1x1xf32, #tpu.memory_space<smem>>, %arg6: memref<8x1xf32, #tpu.memory_space<vmem>>) attributes {dimension_semantics = [#tpu.dimension_semantics<parallel>], iteration_bounds = array<i64: 1>, scalar_prefetch = 0 : i64, scratch_operands = 0 : i64, tpu.core_type = #tpu.core_type<tc>, window_params = [{transform_indices = @transform_0, window_bounds = array<i64: 8, 32>}, {pipeline_mode = #tpu.pipeline_mode<synchronous>, transform_indices = @transform_1, window_bounds = array<i64: 32, 64>}, {pipeline_mode = #tpu.pipeline_mode<synchronous>, transform_indices = @transform_2, window_bounds = array<i64: 1, 64>}, {pipeline_mode = #tpu.pipeline_mode<synchronous>, transform_indices = @transform_3, window_bounds = array<i64: 1, 64>}, {transform_indices = @transform_4, window_bounds = array<i64: 1, 1>}, {transform_indices = @transform_5, window_bounds = array<i64: 8, 1>}]} {
    %c0 = arith.constant 0 : index
    %c0_0 = arith.constant 0 : index
    %0 = vector.load %arg1[%c0, %c0_0] : memref<8x32xbf16, #tpu.memory_space<vmem>>, vector<8x32xbf16>
    %c0_1 = arith.constant 0 : index
    %c0_2 = arith.constant 0 : index
    %1 = vector.load %arg2[%c0_1, %c0_2] : memref<32x64xbf16, #tpu.memory_space<vmem>>, vector<32x64xbf16>
    %cst = arith.constant dense<0.000000e+00> : vector<8x64xf32>
    %2 = tpu.matmul %0, %1, %cst {dimension_numbers = #tpu.dot_dimension_numbers<[1], [0], [0], [1], [0, 0, 1, 1], [], []>} : vector<8x32xbf16>, vector<32x64xbf16>, vector<8x64xf32> -> vector<8x64xf32>
    %c0_3 = arith.constant 0 : index
    %c0_4 = arith.constant 0 : index
    %3 = vector.load %arg3[%c0_3, %c0_4] : memref<1x64xf32, #tpu.memory_space<vmem>>, vector<1x64xf32>
    %4 = vector.broadcast %3 : vector<1x64xf32> to vector<8x64xf32>
    %5 = arith.addf %2, %4 : vector<8x64xf32>
    %cst_5 = arith.constant 0.000000e+00 : f32
    %6 = vector.broadcast %cst_5 : f32 to vector<8x64xf32>
    %7 = arith.maximumf %5, %6 : vector<8x64xf32>
    %c0_6 = arith.constant 0 : index
    %c0_7 = arith.constant 0 : index
    %8 = vector.load %arg4[%c0_6, %c0_7] : memref<1x64xf32, #tpu.memory_space<vmem>>, vector<1x64xf32>
    %9 = vector.broadcast %8 : vector<1x64xf32> to vector<8x64xf32>
    %10 = arith.mulf %7, %9 : vector<8x64xf32>
    %cst_8 = arith.constant dense<0.000000e+00> : vector<8xf32>
    %11 = vector.multi_reduction <add>, %10, %cst_8 [1] : vector<8x64xf32> to vector<8xf32>
    %12 = vector.shape_cast %11 : vector<8xf32> to vector<8x1xf32>
    %c0_9 = arith.constant 0 : index
    %c0_10 = arith.constant 0 : index
    %13 = memref.load %arg5[%c0_9, %c0_10] : memref<1x1xf32, #tpu.memory_space<smem>>
    %14 = vector.broadcast %13 : f32 to vector<8x1xf32>
    %15 = arith.addf %12, %14 : vector<8x1xf32>
    %16 = arith.negf %15 : vector<8x1xf32>
    %17 = math.exp %16 : vector<8x1xf32>
    %cst_11 = arith.constant 1.000000e+00 : f32
    %18 = vector.broadcast %cst_11 : f32 to vector<8x1xf32>
    %19 = arith.addf %18, %17 : vector<8x1xf32>
    %20 = arith.divf %18, %19 : vector<8x1xf32>
    %c0_12 = arith.constant 0 : index
    %c0_13 = arith.constant 0 : index
    %21 = vector.load %arg6[%c0_12, %c0_13] : memref<8x1xf32, #tpu.memory_space<vmem>>, vector<8x1xf32>
    tpu.vector_store %arg6[%c0_12, %c0_13], %20 {strides = array<i32>} : memref<8x1xf32, #tpu.memory_space<vmem>>, vector<8x1xf32>,
    return
  }
  func.func @transform_0(%arg0: i32) -> (i32, i32) {
    %c0_i32 = arith.constant 0 : i32
    %c0_i32_0 = arith.constant 0 : i32
    return %arg0, %c0_i32 : i32, i32
  }
  func.func @transform_1(%arg0: i32) -> (i32, i32) {
    %c0_i32 = arith.constant 0 : i32
    %c0_i32_0 = arith.constant 0 : i32
    %c0_i32_1 = arith.constant 0 : i32
    return %c0_i32, %c0_i32_0 : i32, i32
  }
  func.func @transform_2(%arg0: i32) -> (i32, i32) {
    %c0_i32 = arith.constant 0 : i32
    %c0_i32_0 = arith.constant 0 : i32
    %c0_i32_1 = arith.constant 0 : i32
    return %c0_i32, %c0_i32_0 : i32, i32
  }
  func.func @transform_3(%arg0: i32) -> (i32, i32) {
    %c0_i32 = arith.constant 0 : i32
    %c0_i32_0 = arith.constant 0 : i32
    %c0_i32_1 = arith.constant 0 : i32
    return %c0_i32, %c0_i32_0 : i32, i32
  }
  func.func @transform_4(%arg0: i32) -> (i32, i32) {
    %c0_i32 = arith.constant 0 : i32
    %c0_i32_0 = arith.constant 0 : i32
    %c0_i32_1 = arith.constant 0 : i32
    return %c0_i32, %c0_i32_0 : i32, i32
  }
  func.func @transform_5(%arg0: i32) -> (i32, i32) {
    %c0_i32 = arith.constant 0 : i32
    %c0_i32_0 = arith.constant 0 : i32
    return %arg0, %c0_i32 : i32, i32
  }
}

</mosaic_0001>

<llo_original>
// kernel: query_common_forward.1
$region0: #{query_common_forward.1}
  #allocation0 [shape = 'u32[]', space=smem, size = 0x4, offset = 0x4, fixed_abs, tag = 'smem constant byte address 0x4 - core index']
  #allocation1 [shape = 'u32[144,128]{1,0:T(1,128)}', space=vmem, size = 0x12000, scoped, tag = 'internal scratch']
  #allocation2 [shape = 'f32[1,1]{1,0:T(1,128)S(6)}', space=smem, size = 0x200, scoped, tag = 'scoped memory for query_common_forward.1']
  %s0 = inlined_call_operand.vmem [shape: bf16[8,32], index: 0, kind: input, shape index: {}]
  %s1 = inlined_call_operand.vmem [shape: bf16[32,64], index: 1, kind: input, shape index: {}]
  %s2 = inlined_call_operand.vmem [shape: f32[1,64], index: 2, kind: input, shape index: {}]
  %s3 = inlined_call_operand.vmem [shape: f32[1,64], index: 3, kind: input, shape index: {}]
  %s4 = inlined_call_operand.<no memory space> [shape: f32[1,1], index: 4, kind: input, shape index: {}]
  %s5 = inlined_call_operand.vmem [shape: f32[8,1], index: 5, kind: output, shape index: {}]
  %s6 = sld [smem:[#allocation0]]
  $region30: #{query_common_forward.1} parent=0
    _
  %s8 = ssub.s32 1, %s6
  %s9 = scalar_select 0, %s8, %s6
  %10 = sst [smem:[#allocation2]] %s4
  // Predicated region
  $region2: #{query_common_forward.1} parent=0 // pred_check
    _
  $region3: #{query_common_forward.1} parent=0 // pred_check_branch
    %12 = sbr.rel (0) target = $region5
  $region4: #{query_common_forward.1} parent=0 // pred_region
    _
  $region5: #{query_common_forward.1} parent=0 // pred_fallthru
    _
  // Predicated region
  $region6: #{query_common_forward.1} parent=0 // pred_check
    _
  $region7: #{query_common_forward.1} parent=0 // pred_check_branch
    %14 = sbr.rel (0) target = $region9
  $region8: #{query_common_forward.1} parent=0 // pred_region
    _
  $region9: #{query_common_forward.1} parent=0 // pred_fallthru
    _
  // Predicated region
  $region10: #{query_common_forward.1} parent=0 // pred_check
    _
  $region11: #{query_common_forward.1} parent=0 // pred_check_branch
    %16 = sbr.rel (0) target = $region13
  $region12: #{query_common_forward.1} parent=0 // pred_region
    _
  $region13: #{query_common_forward.1} parent=0 // pred_fallthru
    _
  // Predicated region
  $region14: #{query_common_forward.1} parent=0 // pred_check
    _
  $region15: #{query_common_forward.1} parent=0 // pred_check_branch
    %18 = sbr.rel (0) target = $region17
  $region16: #{query_common_forward.1} parent=0 // pred_region
    _
  $region17: #{query_common_forward.1} parent=0 // pred_fallthru
    _
  // Predicated region
  $region18: #{query_common_forward.1} parent=0 // pred_check
    _
  $region19: #{query_common_forward.1} parent=0 // pred_check_branch
    %20 = sbr.rel (0) target = $region21
  $region20: #{query_common_forward.1} parent=0 // pred_region
    _
  $region21: #{query_common_forward.1} parent=0 // pred_fallthru
    _
  %v22 = vld [vmem:[%s0] sm:$0xf]
  %v23 = vld [vmem:[%s1] sm:$0xf]
  %v24 = vld [vmem:[%s1 + $0x4] sm:$0xf]
  %v25 = vld [vmem:[%s1 + $0x8] sm:$0xf]
  %v26 = vld [vmem:[%s1 + $0xc] sm:$0xf]
  %v27 = vld [vmem:[%s2] sm:$0x1]
  %v29 = vlaneseq
  %v30 = vshrl.u32 %v29, 7
  %v31 = vsub.s32 0, %v30
  %v32 = vrot.slane %v27, %v31
  %v38 = vunpack.c.l.b16 %v23
  %v39 = vunpack.c.l.b16 %v24
  %v40 = vunpack.c.l.b16 %v25
  %v41 = vunpack.c.l.b16 %v26
  %v42 = vpack.c.b16 %v39, %v38
  %v43 = vpack.c.b16 %v41, %v40
  %vm46 = vcmask 261120
  %v48 = vsel %vm46, %v22, 0
  %50 = vmatprep.subr.bf16.mxu0 0
  %51 = vmatpush1.bf16.msra.mxu0 0
  %52 = vmatprep.subr.bf16.mxu0 0
  %53 = vmatpush1.bf16.msra.mxu0 0
  %54 = vmatprep.subr.bf16.mxu0 0
  %55 = vmatpush1.bf16.msra.mxu0 0
  %56 = vmatprep.subr.bf16.mxu0 0
  %57 = vmatpush1.bf16.msra.mxu0 0
  %58 = vmatprep.subr.bf16.mxu0 0
  %59 = vmatpush1.bf16.msra.mxu0 0
  %60 = vmatprep.subr.bf16.mxu0 0
  %61 = vmatpush1.bf16.msra.mxu0 0
  %62 = vmatprep.subr.bf16.mxu0 0
  %63 = vmatpush1.bf16.msra.mxu0 %v43
  %64 = vmatprep.subr.bf16.mxu0 0
  %65 = vmatpush1.bf16.msra.mxu0 %v42
  %66 = vmatprep.subr.bf16.mxu0 0
  %67 = vmatpush2.bf16.msra.mxu0 0
  %68 = vmatprep.subr.bf16.mxu0 0
  %69 = vmatpush2.bf16.msra.mxu0 0
  %70 = vmatprep.subr.bf16.mxu0 0
  %71 = vmatpush2.bf16.msra.mxu0 0
  %72 = vmatprep.subr.bf16.mxu0 0
  %73 = vmatpush2.bf16.msra.mxu0 0
  %74 = vmatprep.subr.bf16.mxu0 0
  %75 = vmatpush2.bf16.msra.mxu0 0
  %76 = vmatprep.subr.bf16.mxu0 0
  %77 = vmatpush2.bf16.msra.mxu0 0
  %78 = vmatprep.subr.bf16.mxu0 0
  %79 = vmatpush2.bf16.msra.mxu0 0
  %80 = vmatprep.subr.bf16.mxu0 0
  %81 = vmatpush2.bf16.msra.mxu0 0
  %82 = vmatprep.mubr.bf16.mxu0 0
  %83 = vmatmul.mubr.bf16.gmra.mxu0 %v48
  %v84 = vpop.f32.mrf.mxu0
  %v85 = vadd.f32 %v32, %v84
  %v86 = vpop.f32.mrf.mxu0
  %v87 = vpop.f32.mrf.mxu0
  %v88 = vpop.f32.mrf.mxu0
  %89 = vdwg.mxu0
  %v90 = vmax.f32 %v85, 0.0
  %v91 = vld [vmem:[%s3] sm:$0x1]
  %v93 = vlaneseq
  %v94 = vshrl.u32 %v93, 7
  %v95 = vsub.s32 0, %v94
  %v96 = vrot.slane %v91, %v95
  %v98 = vmul.f32 %v90, %v96
  %vm99 = vcmask 523264
  %v100 = vsel %vm99, %v98, 0.0
  %101 = vadd.xlane.f32.xlu0 %v100
  %v102 = vpop.xlane.xlu0 %101
  %s103 = sld [smem:[#allocation2]]
  %v104 = vstv %s103
  %v105 = vadd.f32 %v102, %v104
  %v106 = vxor.u32 %v105, 2147483648
  %v107 = vmul.f32 %v106, 1.442695
  %v108 = vpow.pop %v107
  %v109 = vadd.f32 %v108, 1.0
  %v110 = vrcp.pop %v109
  %v111 = vmul.f32 1.0, %v110
  %vm112 = vcmask 7168
  %113 = vst.msk [vmem:[%s5] sm:$0xff] %vm112, %v111
  // Predicated region
  $region22: #{query_common_forward.1} parent=0 // pred_check
    _
  $region23: #{query_common_forward.1} parent=0 // pred_check_branch
    %115 = sbr.rel (0) target = $region25
  $region24: #{query_common_forward.1} parent=0 // pred_region
    _
  $region25: #{query_common_forward.1} parent=0 // pred_fallthru
    _
  // Predicated region
  $region26: #{query_common_forward.1} parent=0 // pred_check
    _
  $region27: #{query_common_forward.1} parent=0 // pred_check_branch
    %117 = sbr.rel (0) target = $region29
  $region28: #{query_common_forward.1} parent=0 // pred_region
    _
  $region29: #{query_common_forward.1} parent=0 // pred_fallthru
    _

</llo_original>
